<compile_context>
chip_gen: v5e
topology: v5e:2x2
jax: 0.10.0
libtpu: 0.0.40
codegen_flags: <defaults>
</compile_context>

<pallas_src>
import functools

import jax
import jax.numpy as jnp
from jax.experimental import pallas as pl
from jax.experimental.pallas import tpu as pltpu


def _ceil_to(n, m):
    return -(-n // m) * m


def self_attention_kernel(x_ref, wt_ref, bw_ref, urow_ref, bu_ref, o_ref, *,
                          chunk_batch, seq_valid):
    """One grid step = `tb` batch elements, processed `chunk_batch` at a time.

    x_ref   : (tb, S_pad, D)  input tile (S_pad % 8 == 0)
    wt_ref  : (D, H)          W.weight^T            (VMEM resident)
    bw_ref  : (1, H)          W.bias                (VMEM resident)
    urow_ref: (1, H)          u.weight single row   (VMEM resident)
    bu_ref  : (1, 1)          u.bias                (VMEM resident)
    o_ref   : (tb, D)         pooled outputs (leading grid dim squeezed)
    """
    tb, s_pad, d = x_ref.shape
    cb = chunk_batch
    num_chunks = tb // cb

    # Small constant operands: load once, reuse across all chunks.
    wt = wt_ref[...]
    bw = bw_ref[...]
    urow = urow_ref[...]
    bu = bu_ref[...]

    @pl.loop(0, num_chunks)
    def _(c):
        r0 = pl.multiple_of(c * cb, cb)
        x = x_ref[pl.ds(r0, cb), :, :]                        # (cb, S_pad, D)

        # Hidden projection on the MXU with a dense M = cb*S_pad tile.
        # Free view: S_pad is a sublane multiple, so no relayout copy.
        x2 = x.reshape(cb * s_pad, d)
        h = jnp.tanh(
            jnp.dot(x2, wt, preferred_element_type=jnp.float32) + bw
        )                                                     # (cb*S_pad, H)

        # Attention logits: H -> 1 projection on the VPU/XLU (an N=1 matmul
        # would waste a full MXU pass to produce a single lane).
        s = jnp.sum(h * urow, axis=-1, keepdims=True)         # (cb*S_pad, 1)
        s = s.reshape(cb, s_pad, 1) + bu                      # (cb, S_pad, 1)

        if seq_valid < s_pad:  # static: mask wrapper-side sequence padding
            seq_ids = jax.lax.broadcasted_iota(jnp.int32, s.shape, 1)
            s = jnp.where(seq_ids < seq_valid, s, -jnp.inf)

        # Softmax over the sequence axis (PyTorch dim=1), max-subtracted.
        m = jnp.max(s, axis=1, keepdims=True)                 # (cb, 1, 1)
        e = jnp.exp(s - m)                                    # (cb, S_pad, 1)
        denom = jnp.sum(e, axis=1, keepdims=True)             # (cb, 1, 1)
        inv = pl.reciprocal(denom, approx=True)               # EUP slot (cheap)
        inv = inv * (2.0 - denom * inv)                       # Newton -> full precision
        a = e * inv                                           # (cb, S_pad, 1)

        # Weighted sum over the sequence -> (cb, D).
        # TODO(synk): if VPU/XLU ever binds at large S on v6e/v7x, route this
        # through the idle MXU as a block-diagonal (cb, cb*S_pad)@(cb*S_pad, D).
        o_ref[pl.ds(r0, cb), :] = jnp.sum(a * x, axis=1).astype(o_ref.dtype)


def _pick_tiles(batch, seq_pad, *, target_rows=8192, chunk_rows=512):
    """(tb, cb): batch elements per grid step and per inner chunk.

    tb sizes the HBM->VMEM DMA block (big enough to amortize the ~0.35us
    per-grid-step pipeline overhead); cb bounds live vreg/VMEM intermediates.
    """
    tb = max(1, target_rows // max(seq_pad, 1))
    if batch >= 2:
        # Keep >= 2 grid steps so v7x's two TensorCores both get work.
        tb = min(tb, (batch + 1) // 2)
    tb = min(tb, batch)
    cb = max(1, min(tb, chunk_rows // max(seq_pad, 1)))
    while tb % cb:          # cb must divide tb exactly (no OOB VMEM slices)
        cb -= 1
    return tb, cb


def self_attention(x, w_weight, w_bias, u_weight, u_bias, *,
                   batch_tile=None, target_rows=8192, chunk_rows=512):
    """x: (B, S, D) float32; weights in PyTorch nn.Linear layout. Returns (B, D)."""
    B, S, D = x.shape
    H = w_weight.shape[0]

    # Pad the sequence to a sublane multiple so the in-kernel reshape is free.
    S_pad = _ceil_to(S, 8)
    if S_pad != S:
        x = jnp.pad(x, ((0, 0), (0, S_pad - S), (0, 0)))

    if batch_tile is not None:
        tb = max(1, min(int(batch_tile), B))
        cb = max(1, min(tb, chunk_rows // max(S_pad, 1)))
        while tb % cb:
            cb -= 1
    else:
        tb, cb = _pick_tiles(B, S_pad, target_rows=target_rows,
                             chunk_rows=chunk_rows)
    grid = pl.cdiv(B, tb)   # ragged tail: extra rows computed, sliced off below

    wt = jnp.asarray(w_weight, jnp.float32).T.reshape(D, H)   # (D, H)
    bw = jnp.asarray(w_bias, jnp.float32).reshape(1, H)       # (1, H)
    urow = jnp.asarray(u_weight, jnp.float32).reshape(1, H)   # (1, H)
    bu = jnp.asarray(u_bias, jnp.float32).reshape(1, 1)       # (1, 1)

    # Explicit VMEM budget.  D (=32) and H (=16) pad to 128 lanes in VMEM, so
    # the x / out buffers cost 4x their nominal bytes; x is double-buffered.
    f32b = 4
    x_blk = tb * S_pad * _ceil_to(D, 128) * f32b
    o_blk = _ceil_to(tb, 8) * _ceil_to(D, 128) * f32b
    w_res = (_ceil_to(D, 8) + 3 * 8) * _ceil_to(H, 128) * f32b
    headroom = 8 << 20                       # per-chunk intermediates + spills
    vmem_limit = 2 * x_blk + 2 * o_blk + w_res + headroom
    # Floor at a generous default; cap inside v7x's 64 MiB physical VMEM / TC.
    vmem_limit = int(min(max(vmem_limit, 32 << 20), 48 << 20))

    kernel = functools.partial(self_attention_kernel,
                               chunk_batch=cb, seq_valid=S)

    # Small constant operands stay VMEM-resident (no per-step re-DMA).
    vmem_resident = pl.BlockSpec(memory_space=pltpu.MemorySpace.VMEM)

    # Output laid out (grid, tb, D): every out block is full-dim aligned, so
    # any tb (including tb=1 for tiny B) is legal; the wrapper slices the tail.
    # TODO(synk): pack the output lane-dense ((B//4, 4*D)) if profiles ever show
    # the masked D=32 store mattering (output traffic is S x smaller than input).
    out3 = pl.pallas_call(
        kernel,
        out_shape=jax.ShapeDtypeStruct((grid, tb, D), x.dtype),
        grid_spec=pltpu.PrefetchScalarGridSpec(
            num_scalar_prefetch=0,
            grid=(grid,),
            in_specs=[
                pl.BlockSpec((tb, S_pad, D), lambda b: (b, 0, 0)),
                vmem_resident,   # wt
                vmem_resident,   # bw
                vmem_resident,   # urow
                vmem_resident,   # bu
            ],
            out_specs=pl.BlockSpec((None, tb, D), lambda b: (b, 0, 0)),
        ),
        compiler_params=pltpu.CompilerParams(
            dimension_semantics=("parallel",),
            vmem_limit_bytes=vmem_limit,
        ),
    )(x, wt, bw, urow, bu)
    return out3.reshape(grid * tb, D)[:B]


def self_attention_ref(x, w_weight, w_bias, u_weight, u_bias):
    """Pure-JAX reference mirroring the PyTorch forward."""
    u = jnp.tanh(jnp.einsum("bsd,hd->bsh", x, w_weight) + w_bias)     # (B,S,H)
    logits = jnp.einsum("bsh,oh->bso", u, u_weight) + u_bias          # (B,S,1)
    a = jax.nn.softmax(logits, axis=1)                                # (B,S,1)
    return jnp.sum(a * x, axis=1)                                     # (B,D)


if __name__ == "__main__":
    B, S, D, H = 2, 8, 32, 16  # batch, seq_len, input_size, hidden_size

    key = jax.random.PRNGKey(0)
    kx, kw, kbw, ku, kbu = jax.random.split(key, 5)

    x = jax.random.normal(kx, (B, S, D), dtype=jnp.float32)
    # nn.Linear(input_size, hidden_size): weight (H, D), bias (H,)
    w_weight = jax.random.normal(kw, (H, D), dtype=jnp.float32) * (1.0 / jnp.sqrt(D))
    w_bias = jax.random.normal(kbw, (H,), dtype=jnp.float32) * 0.1
    # nn.Linear(hidden_size, 1): weight (1, H), bias (1,)
    u_weight = jax.random.normal(ku, (1, H), dtype=jnp.float32) * (1.0 / jnp.sqrt(H))
    u_bias = jax.random.normal(kbu, (1,), dtype=jnp.float32) * 0.1

    out = self_attention(x, w_weight, w_bias, u_weight, u_bias)
    out = jax.block_until_ready(out)

    ref = self_attention_ref(x, w_weight, w_bias, u_weight, u_bias)
    assert out.shape == (B, D), out.shape
    err = float(jnp.max(jnp.abs(out - ref)))
    assert jnp.allclose(out, ref, atol=1e-5, rtol=1e-5), err

    print("KERNEL_OK")
</pallas_src>

<mosaic_0001>
module attributes {stable_mosaic.version = 11 : i64} {
  func.func @self_attention_kernel(%arg0: i32, %arg1: memref<1x8x32xf32, #tpu.memory_space<vmem>>, %arg2: memref<32x16xf32, #tpu.memory_space<vmem>>, %arg3: memref<1x16xf32, #tpu.memory_space<vmem>>, %arg4: memref<1x16xf32, #tpu.memory_space<vmem>>, %arg5: memref<1x1xf32, #tpu.memory_space<vmem>>, %arg6: memref<1x1x32xf32, #tpu.memory_space<vmem>>) attributes {dimension_semantics = [#tpu.dimension_semantics<parallel>], iteration_bounds = array<i64: 2>, scalar_prefetch = 0 : i64, scratch_operands = 0 : i64, tpu.core_type = #tpu.core_type<tc>, window_params = [{transform_indices = @transform_0, window_bounds = array<i64: 1, 8, 32>}, {pipeline_mode = #tpu.pipeline_mode<synchronous>, transform_indices = @transform_1, window_bounds = array<i64: 32, 16>}, {pipeline_mode = #tpu.pipeline_mode<synchronous>, transform_indices = @transform_2, window_bounds = array<i64: 1, 16>}, {pipeline_mode = #tpu.pipeline_mode<synchronous>, transform_indices = @transform_3, window_bounds = array<i64: 1, 16>}, {pipeline_mode = #tpu.pipeline_mode<synchronous>, transform_indices = @transform_4, window_bounds = array<i64: 1, 1>}, {transform_indices = @transform_5, window_bounds = array<i64: 1, 1, 32>}]} {
    %c0 = arith.constant 0 : index
    %c0_0 = arith.constant 0 : index
    %0 = vector.load %arg2[%c0, %c0_0] : memref<32x16xf32, #tpu.memory_space<vmem>>, vector<32x16xf32>
    %c0_1 = arith.constant 0 : index
    %c0_2 = arith.constant 0 : index
    %1 = vector.load %arg3[%c0_1, %c0_2] : memref<1x16xf32, #tpu.memory_space<vmem>>, vector<1x16xf32>
    %c0_3 = arith.constant 0 : index
    %c0_4 = arith.constant 0 : index
    %2 = vector.load %arg4[%c0_3, %c0_4] : memref<1x16xf32, #tpu.memory_space<vmem>>, vector<1x16xf32>
    %c0_5 = arith.constant 0 : index
    %c0_6 = arith.constant 0 : index
    %3 = vector.load %arg5[%c0_5, %c0_6] : memref<1x1xf32, #tpu.memory_space<vmem>>, vector<1x1xf32>
    %c0_i32 = arith.constant 0 : i32
    %c1_i32 = arith.constant 1 : i32
    %4 = arith.muli %c0_i32, %c1_i32 : i32
    %c0_i32_7 = arith.constant 0 : i32
    %5 = arith.addi %c0_i32_7, %4 : i32
    %c1_i32_8 = arith.constant 1 : i32
    %6 = arith.muli %5, %c1_i32_8 : i32
    %7 = tpu.assume_multiple %6, 1 : i32
    %8 = arith.index_cast %7 : i32 to index
    %c0_9 = arith.constant 0 : index
    %c0_10 = arith.constant 0 : index
    %9 = vector.load %arg1[%8, %c0_9, %c0_10] : memref<1x8x32xf32, #tpu.memory_space<vmem>>, vector<1x8x32xf32>
    %10 = vector.shape_cast %9 : vector<1x8x32xf32> to vector<8x32xf32>
    %cst = arith.constant dense<0.000000e+00> : vector<8x16xf32>
    %11 = tpu.matmul %10, %0, %cst {dimension_numbers = #tpu.dot_dimension_numbers<[1], [0], [0], [1], [0, 0, 1, 1], [], []>} : vector<8x32xf32>, vector<32x16xf32>, vector<8x16xf32> -> vector<8x16xf32>
    %12 = vector.broadcast %1 : vector<1x16xf32> to vector<8x16xf32>
    %13 = arith.addf %11, %12 : vector<8x16xf32>
    %14 = math.tanh %13 : vector<8x16xf32>
    %15 = vector.broadcast %2 : vector<1x16xf32> to vector<8x16xf32>
    %16 = arith.mulf %14, %15 : vector<8x16xf32>
    %cst_11 = arith.constant dense<0.000000e+00> : vector<8xf32>
    %17 = vector.multi_reduction <add>, %16, %cst_11 [1] : vector<8x16xf32> to vector<8xf32>
    %18 = vector.shape_cast %17 : vector<8xf32> to vector<8x1xf32>
    %19 = vector.shape_cast %18 : vector<8x1xf32> to vector<1x8x1xf32>
    %20 = vector.shape_cast %3 : vector<1x1xf32> to vector<1x1x1xf32>
    %21 = vector.broadcast %20 : vector<1x1x1xf32> to vector<1x8x1xf32>
    %22 = arith.addf %19, %21 : vector<1x8x1xf32>
    %cst_12 = arith.constant dense<0xFF800000> : vector<1x1xf32>
    %23 = vector.multi_reduction <maximumf>, %22, %cst_12 [1] : vector<1x8x1xf32> to vector<1x1xf32>
    %24 = vector.shape_cast %23 : vector<1x1xf32> to vector<1x1x1xf32>
    %25 = vector.broadcast %24 : vector<1x1x1xf32> to vector<1x8x1xf32>
    %26 = arith.subf %22, %25 : vector<1x8x1xf32>
    %27 = math.exp %26 : vector<1x8x1xf32>
    %cst_13 = arith.constant dense<0.000000e+00> : vector<1x1xf32>
    %28 = vector.multi_reduction <add>, %27, %cst_13 [1] : vector<1x8x1xf32> to vector<1x1xf32>
    %29 = vector.shape_cast %28 : vector<1x1xf32> to vector<1x1x1xf32>
    %30 = tpu.reciprocal %29 {approx = true} : vector<1x1x1xf32> -> vector<1x1x1xf32>
    %31 = arith.mulf %29, %30 : vector<1x1x1xf32>
    %cst_14 = arith.constant 2.000000e+00 : f32
    %32 = vector.broadcast %cst_14 : f32 to vector<1x1x1xf32>
    %33 = arith.subf %32, %31 : vector<1x1x1xf32>
    %34 = arith.mulf %30, %33 : vector<1x1x1xf32>
    %35 = vector.broadcast %34 : vector<1x1x1xf32> to vector<1x8x1xf32>
    %36 = arith.mulf %27, %35 : vector<1x8x1xf32>
    %37 = vector.broadcast %36 : vector<1x8x1xf32> to vector<1x8x32xf32>
    %38 = arith.mulf %37, %9 : vector<1x8x32xf32>
    %cst_15 = arith.constant dense<0.000000e+00> : vector<1x32xf32>
    %39 = vector.multi_reduction <add>, %38, %cst_15 [1] : vector<1x8x32xf32> to vector<1x32xf32>
    %c0_16 = arith.constant 0 : index
    %40 = arith.index_cast %7 : i32 to index
    %c0_17 = arith.constant 0 : index
    %41 = vector.load %arg6[%c0_16, %40, %c0_17] : memref<1x1x32xf32, #tpu.memory_space<vmem>>, vector<1x1x32xf32>
    %42 = vector.shape_cast %41 : vector<1x1x32xf32> to vector<1x32xf32>
    %43 = vector.shape_cast %39 : vector<1x32xf32> to vector<1x1x32xf32>
    tpu.vector_store %arg6[%c0_16, %40, %c0_17], %43 {strides = array<i32>} : memref<1x1x32xf32, #tpu.memory_space<vmem>>, vector<1x1x32xf32>,
    %c1_i32_18 = arith.constant 1 : i32
    return
  }
  func.func @transform_0(%arg0: i32) -> (i32, i32, i32) {
    %c0_i32 = arith.constant 0 : i32
    %c0_i32_0 = arith.constant 0 : i32
    %c0_i32_1 = arith.constant 0 : i32
    return %arg0, %c0_i32, %c0_i32_0 : i32, i32, i32
  }
  func.func @transform_1(%arg0: i32) -> (i32, i32) {
    %c0_i32 = arith.constant 0 : i32
    %c0_i32_0 = arith.constant 0 : i32
    %c0_i32_1 = arith.constant 0 : i32
    return %c0_i32, %c0_i32_0 : i32, i32
  }
  func.func @transform_2(%arg0: i32) -> (i32, i32) {
    %c0_i32 = arith.constant 0 : i32
    %c0_i32_0 = arith.constant 0 : i32
    %c0_i32_1 = arith.constant 0 : i32
    return %c0_i32, %c0_i32_0 : i32, i32
  }
  func.func @transform_3(%arg0: i32) -> (i32, i32) {
    %c0_i32 = arith.constant 0 : i32
    %c0_i32_0 = arith.constant 0 : i32
    %c0_i32_1 = arith.constant 0 : i32
    return %c0_i32, %c0_i32_0 : i32, i32
  }
  func.func @transform_4(%arg0: i32) -> (i32, i32) {
    %c0_i32 = arith.constant 0 : i32
    %c0_i32_0 = arith.constant 0 : i32
    %c0_i32_1 = arith.constant 0 : i32
    return %c0_i32, %c0_i32_0 : i32, i32
  }
  func.func @transform_5(%arg0: i32) -> (i32, i32, i32) {
    %c0_i32 = arith.constant 0 : i32
    %c0_i32_0 = arith.constant 0 : i32
    %c0_i32_1 = arith.constant 0 : i32
    return %arg0, %c0_i32, %c0_i32_0 : i32, i32, i32
  }
}

</mosaic_0001>

<llo_original>
// kernel: tpu_custom_call.1
$region0: #{tpu_custom_call.1}
  #allocation0 [shape = 'u32[]', space=smem, size = 0x4, offset = 0x4, fixed_abs, tag = 'smem constant byte address 0x4 - core index']
  #allocation1 [shape = 'u32[72,128]{1,0:T(1,128)}', space=vmem, size = 0x9000, scoped, tag = 'internal scratch']
  #allocation2 [shape = 'f32[1,1]{1,0:T(1,128)S(1)}', space=vmem, size = 0x200, scoped, tag = 'scoped memory for tpu_custom_call.1']
  %s0 = inlined_call_operand.vmem [shape: f32[2,8,32], index: 0, kind: input, shape index: {}]
  %s1 = inlined_call_operand.vmem [shape: f32[32,16], index: 1, kind: input, shape index: {}]
  %s2 = inlined_call_operand.vmem [shape: f32[1,16], index: 2, kind: input, shape index: {}]
  %s3 = inlined_call_operand.vmem [shape: f32[1,16], index: 3, kind: input, shape index: {}]
  %s4 = inlined_call_operand.<no memory space> [shape: f32[1,1], index: 4, kind: input, shape index: {}]
  %s5 = inlined_call_operand.hbm [shape: f32[2,1,32], index: 5, kind: output, shape index: {}]
  %s6 = sld [smem:[#allocation0]]
  $region53: #{tpu_custom_call.1} parent=0
    _
  %s8 = ssub.s32 1, %s6
  %s9 = scalar_select 0, %s8, %s6
  %v10 = vstv %s4
  %11 = vst [vmem:[#allocation2] sm:$0x1] %v10
  $region1: #{tpu_custom_call.1} parent=0
    #allocation3 [shape = 'u8[1024]{0}', space=vmem, size = 0x400, scoped, tag = 'output window, operand 0']
    #allocation4 [shape = 's32[2]{0}', space=sflag, size = 0x8, scoped, tag = 'scoped memory for tpu_custom_call.1']
    %12 = vsyncpa [#allocation4], 0
    %s13 = scalar_lea.sflag [#allocation4], 1
    %14 = vsyncpa %s13, 0
    loop: start=0, step=1, limit=4
    $region2: #{tpu_custom_call.1} parent=1 // loop_pre_header
      _
    $region3: #{tpu_custom_call.1} parent=1 // loop_header
      %s16 = sphi 0, %s20
      %p17 = scmp.ge.s32.totalorder %s16, 4
      %s26 = sphi 0, %s28
      %s29 = sphi 0, %s26
      %s30 = sphi 0, %s29
      %s46 = sphi 0, %s30
      %s50 = sphi 0, %s50
      %s52 = sphi 0, %s50
      %s53 = sphi 0, %s52
      %s67 = sphi 0, %s53
      %s71 = sphi 0, %s71
      %s73 = sphi 0, %s71
      %s74 = sphi 0, %s73
      %s88 = sphi 0, %s74
      %s92 = sphi 0, %s92
      %s94 = sphi 0, %s92
      %s95 = sphi 0, %s94
      %s109 = sphi 0, %s95
      %s113 = sphi 0, %s113
      %s115 = sphi 0, %s113
      %s116 = sphi 0, %s115
      %s130 = sphi 0, %s116
      %s136 = sphi 0, %s138
      %s139 = sphi 0, %s136
      %s140 = sphi 0, %s139
      %s156 = sphi 0, %s140
    $region4: #{tpu_custom_call.1} parent=1 // loop_header_branch
      %19 = sbr.rel (%p17) target = $region8
    $region5: #{tpu_custom_call.1} parent=1 // loop_body
      %s21 = ssub.s32 %s16, 1
      %s22 = ssub.s32 %s16, 2
      %s23 = sadd.s32 %s16, 1
      %s24 = ssub.s32 %s16, %s23
      %p25 = scmp.eq.s32.totalorder %s24, 0
      %s27 = sadd.s32 %s26, 1
      %s28 = scalar_select %p25, %s26, %s27
      %p31 = pneg %p25
      %p32 = scmp.eq.s32.totalorder %s16, 1
      %p33 = por %p31, %p32
      %p34 = scmp.ne.s32.totalorder %s26, %s29
      %p35 = scmp.eq.s32.totalorder %s16, 0
      %p36 = por %p34, %p35
      %p37 = scmp.ne.s32.totalorder %s26, %s29
      %p38 = scmp.eq.s32.totalorder %s21, 1
      %p39 = por %p37, %p38
      %p40 = scmp.ne.s32.totalorder %s29, %s30
      %p41 = scmp.eq.s32.totalorder %s21, 0
      %p42 = por %p40, %p41
      %p43 = scmp.ne.s32.totalorder %s29, %s30
      %p44 = scmp.eq.s32.totalorder %s22, 1
      %p45 = por %p43, %p44
      %p47 = scmp.ne.s32.totalorder %s30, %s46
      %p48 = scmp.eq.s32.totalorder %s22, 0
      %p49 = por %p47, %p48
      %s51 = sadd.s32 %s50, 1
      %p54 = scmp.eq.s32.totalorder %s16, 1
      %p55 = scmp.ne.s32.totalorder %s50, %s52
      %p56 = scmp.eq.s32.totalorder %s16, 0
      %p57 = por %p55, %p56
      %p58 = scmp.ne.s32.totalorder %s50, %s52
      %p59 = scmp.eq.s32.totalorder %s21, 1
      %p60 = por %p58, %p59
      %p61 = scmp.ne.s32.totalorder %s52, %s53
      %p62 = scmp.eq.s32.totalorder %s21, 0
      %p63 = por %p61, %p62
      %p64 = scmp.ne.s32.totalorder %s52, %s53
      %p65 = scmp.eq.s32.totalorder %s22, 1
      %p66 = por %p64, %p65
      %p68 = scmp.ne.s32.totalorder %s53, %s67
      %p69 = scmp.eq.s32.totalorder %s22, 0
      %p70 = por %p68, %p69
      %s72 = sadd.s32 %s71, 1
      %p75 = scmp.eq.s32.totalorder %s16, 1
      %p76 = scmp.ne.s32.totalorder %s71, %s73
      %p77 = scmp.eq.s32.totalorder %s16, 0
      %p78 = por %p76, %p77
      %p79 = scmp.ne.s32.totalorder %s71, %s73
      %p80 = scmp.eq.s32.totalorder %s21, 1
      %p81 = por %p79, %p80
      %p82 = scmp.ne.s32.totalorder %s73, %s74
      %p83 = scmp.eq.s32.totalorder %s21, 0
      %p84 = por %p82, %p83
      %p85 = scmp.ne.s32.totalorder %s73, %s74
      %p86 = scmp.eq.s32.totalorder %s22, 1
      %p87 = por %p85, %p86
      %p89 = scmp.ne.s32.totalorder %s74, %s88
      %p90 = scmp.eq.s32.totalorder %s22, 0
      %p91 = por %p89, %p90
      %s93 = sadd.s32 %s92, 1
      %p96 = scmp.eq.s32.totalorder %s16, 1
      %p97 = scmp.ne.s32.totalorder %s92, %s94
      %p98 = scmp.eq.s32.totalorder %s16, 0
      %p99 = por %p97, %p98
      %p100 = scmp.ne.s32.totalorder %s92, %s94
      %p101 = scmp.eq.s32.totalorder %s21, 1
      %p102 = por %p100, %p101
      %p103 = scmp.ne.s32.totalorder %s94, %s95
      %p104 = scmp.eq.s32.totalorder %s21, 0
      %p105 = por %p103, %p104
      %p106 = scmp.ne.s32.totalorder %s94, %s95
      %p107 = scmp.eq.s32.totalorder %s22, 1
      %p108 = por %p106, %p107
      %p110 = scmp.ne.s32.totalorder %s95, %s109
      %p111 = scmp.eq.s32.totalorder %s22, 0
      %p112 = por %p110, %p111
      %s114 = sadd.s32 %s113, 1
      %p117 = scmp.eq.s32.totalorder %s16, 1
      %p118 = scmp.ne.s32.totalorder %s113, %s115
      %p119 = scmp.eq.s32.totalorder %s16, 0
      %p120 = por %p118, %p119
      %p121 = scmp.ne.s32.totalorder %s113, %s115
      %p122 = scmp.eq.s32.totalorder %s21, 1
      %p123 = por %p121, %p122
      %p124 = scmp.ne.s32.totalorder %s115, %s116
      %p125 = scmp.eq.s32.totalorder %s21, 0
      %p126 = por %p124, %p125
      %p127 = scmp.ne.s32.totalorder %s115, %s116
      %p128 = scmp.eq.s32.totalorder %s22, 1
      %p129 = por %p127, %p128
      %p131 = scmp.ne.s32.totalorder %s116, %s130
      %p132 = scmp.eq.s32.totalorder %s22, 0
      %p133 = por %p131, %p132
      %s134 = ssub.s32 %s16, %s23
      %p135 = scmp.eq.s32.totalorder %s134, 0
      %s137 = sadd.s32 %s136, 1
      %s138 = scalar_select %p135, %s136, %s137
      %p141 = pneg %p135
      %p142 = scmp.eq.s32.totalorder %s16, 1
      %p143 = por %p141, %p142
      %p144 = scmp.ne.s32.totalorder %s136, %s139
      %p145 = scmp.eq.s32.totalorder %s16, 0
      %p146 = por %p144, %p145
      %p147 = scmp.ne.s32.totalorder %s136, %s139
      %p148 = scmp.eq.s32.totalorder %s21, 1
      %p149 = por %p147, %p148
      %p150 = scmp.ne.s32.totalorder %s139, %s140
      %p151 = scmp.eq.s32.totalorder %s21, 0
      %p152 = por %p150, %p151
      %p153 = scmp.ne.s32.totalorder %s139, %s140
      %p154 = scmp.eq.s32.totalorder %s22, 1
      %p155 = por %p153, %p154
      %p157 = scmp.ne.s32.totalorder %s140, %s156
      %p158 = scmp.eq.s32.totalorder %s22, 0
      %p159 = por %p157, %p158
      %p160 = scmp.le.s32.totalorder 1, %s16
      %p161 = scmp.lt.s32.totalorder %s16, 3
      %p162 = pnand %p160, %p161
      %p163 = pneg %p162
      // Predicated region
      $region9: #{tpu_custom_call.1} parent=5 // pred_check
        _
      $region10: #{tpu_custom_call.1} parent=5 // pred_check_branch
        %165 = sbr.rel (%p162) target = $region12
      $region11: #{tpu_custom_call.1} parent=5 // pred_region
        %s166 = ssub.s32 %s16, 1
        // Predicated region
        $region13: #{tpu_custom_call.1} parent=11 // pred_check
          %p167 = pneg %p63
        $region14: #{tpu_custom_call.1} parent=11 // pred_check_branch
          %169 = sbr.rel (%p167) target = $region16
        $region15: #{tpu_custom_call.1} parent=11 // pred_region
          _
        $region16: #{tpu_custom_call.1} parent=11 // pred_fallthru
          _
        // Predicated region
        $region17: #{tpu_custom_call.1} parent=11 // pred_check
          %p170 = pneg %p84
        $region18: #{tpu_custom_call.1} parent=11 // pred_check_branch
          %172 = sbr.rel (%p170) target = $region20
        $region19: #{tpu_custom_call.1} parent=11 // pred_region
          _
        $region20: #{tpu_custom_call.1} parent=11 // pred_fallthru
          _
        // Predicated region
        $region21: #{tpu_custom_call.1} parent=11 // pred_check
          %p173 = pneg %p105
        $region22: #{tpu_custom_call.1} parent=11 // pred_check_branch
          %175 = sbr.rel (%p173) target = $region24
        $region23: #{tpu_custom_call.1} parent=11 // pred_region
          _
        $region24: #{tpu_custom_call.1} parent=11 // pred_fallthru
          _
        // Predicated region
        $region25: #{tpu_custom_call.1} parent=11 // pred_check
          %p176 = pneg %p126
        $region26: #{tpu_custom_call.1} parent=11 // pred_check_branch
          %178 = sbr.rel (%p176) target = $region28
        $region27: #{tpu_custom_call.1} parent=11 // pred_region
          _
        $region28: #{tpu_custom_call.1} parent=11 // pred_fallthru
          _
      $region12: #{tpu_custom_call.1} parent=5 // pred_fallthru
        _
      %p179 = scmp.lt.s32.totalorder %s16, 2
      // Predicated region
      $region29: #{tpu_custom_call.1} parent=5 // pred_check
        %p180 = pneg %p179
      $region30: #{tpu_custom_call.1} parent=5 // pred_check_branch
        %182 = sbr.rel (%p180) target = $region32
      $region31: #{tpu_custom_call.1} parent=5 // pred_region
        // Predicated region
        $region33: #{tpu_custom_call.1} parent=31 // pred_check
          %p183 = pneg %p36
        $region34: #{tpu_custom_call.1} parent=31 // pred_check_branch
          %185 = sbr.rel (%p183) target = $region36
        $region35: #{tpu_custom_call.1} parent=31 // pred_region
          %p186 = scmp.lt.s32.totalorder %s16, 1
          %s187 = scalar_select %p186, %s16, 1
          %s188 = smul.addr %s187, 8
          %s189 = scalar_lea.vmem %s0, %s188
        $region36: #{tpu_custom_call.1} parent=31 // pred_fallthru
          _
      $region32: #{tpu_custom_call.1} parent=5 // pred_fallthru
        _
      %p190 = scmp.le.s32.totalorder 1, %s16
      %p191 = scmp.lt.s32.totalorder %s16, 3
      %p192 = pnand %p190, %p191
      %p193 = pneg %p192
      // Predicated region
      $region37: #{tpu_custom_call.1} parent=5 // pred_check
        _
      $region38: #{tpu_custom_call.1} parent=5 // pred_check_branch
        %195 = sbr.rel (%p192) target = $region40
      $region39: #{tpu_custom_call.1} parent=5 // pred_region
        %s196 = ssub.s32 %s16, 1
        %p197 = scmp.lt.s32.totalorder %s21, 1
        %s198 = scalar_select %p197, %s21, 1
        %s199 = smul.addr %s198, 8
        %s200 = scalar_lea.vmem %s0, %s199
        %p201 = pneg %p42
        %p202 = pneg %p39
        %p203 = pneg %p63
        %p204 = pneg %p60
        %p205 = pneg %p84
        %p206 = pneg %p81
        %p207 = pneg %p105
        %p208 = pneg %p102
        %p209 = pneg %p126
        %p210 = pneg %p123
        %p211 = pneg %p152
        %p212 = pneg %p149
        %s213 = sand.u32 %s139, 1
        %s214 = scalar_lea.sflag [#allocation4], %s213
        %s215 = sand.u32 %s139, 1
        %s216 = scalar_lea.vmem [#allocation3], %s215
        %p217 = scmp.lt.s32.totalorder %s21, 1
        %s218 = scalar_select %p217, %s21, 1
        %s219 = smul.addr %s218, 8
        %s220 = scalar_lea.vmem %s0, %s219
        %v221 = vld [vmem:[%s1] sm:$0xff]
        %v222 = vld [vmem:[%s1 + $0x8] sm:$0xff]
        %v223 = vld [vmem:[%s1 + $0x10] sm:$0xff]
        %v224 = vld [vmem:[%s1 + $0x18] sm:$0xff]
        %v225 = vld [vmem:[%s2] sm:$0x1]
        %v226 = vld [vmem:[%s3] sm:$0x1]
        %v227 = vld [vmem:[#allocation2] sm:$0x1]
        %s228 = smul.u32 0, 8
        %s229 = scalar_lea.vmem %s220, %s228
        %v230 = vld [vmem:[%s229] sm:$0xff]
        %v232 = vperm.slane %v225, 0
        %vm234 = vcmask 261120
        %v236 = vsel %vm234, %v230, 0
        %238 = vmatpush.msra.mxu0 0.0
        %239 = vmatpush.msra.mxu0 0.0
        %240 = vmatpush.msra.mxu0 0.0
        %241 = vmatpush.msra.mxu0 0.0
        %242 = vmatpush.msra.mxu0 0.0
        %243 = vmatpush.msra.mxu0 0.0
        %244 = vmatpush.msra.mxu0 0.0
        %245 = vmatpush.msra.mxu0 0.0
        %246 = vmatpush.msra.mxu0 0.0
        %247 = vmatpush.msra.mxu0 0.0
        %248 = vmatpush.msra.mxu0 0.0
        %249 = vmatpush.msra.mxu0 0.0
        %250 = vmatpush.msra.mxu0 %v224
        %251 = vmatpush.msra.mxu0 %v223
        %252 = vmatpush.msra.mxu0 %v222
        %253 = vmatpush.msra.mxu0 %v221
        %254 = vmatmul.f32.gmra.mxu0 %v236
        %v255 = vpop.f32.mrf.mxu0
        %v256 = vadd.f32 %v232, %v255
        %257 = vdwg.mxu0
        %v258 = vtanh.pop %v256
        %v260 = vperm.slane %v226, 0
        %v262 = vmul.f32 %v258, %v260
        %vm263 = vcmask 130048
        %v264 = vsel %vm263, %v262, 0.0
        %265 = vadd.xlane.f32.xlu0 %v264
        %v266 = vpop.xlane.xlu0 %265
        %v268 = vperm.slane %v227, 0
        %v270 = vadd.f32 %v266, %v268
        %vm271 = vcmask 7168
        %v272 = vsel %vm271, %v270, -inf
        %v273 = vrot.slane %v272, 4
        %v274 = vmax.f32 %v272, %v273
        %v275 = vrot.slane %v274, 2
        %v276 = vmax.f32 %v274, %v275
        %v277 = vrot.slane %v276, 1
        %v278 = vmax.f32 %v276, %v277
        %v279 = vsub.f32 %v270, %v278
        %v280 = vmul.f32 %v279, 1.442695
        %v281 = vpow.pop %v280
        %v282 = vsel %vm271, %v281, 0.0
        %v283 = vrot.slane %v282, 4
        %v284 = vadd.f32 %v282, %v283
        %v285 = vrot.slane %v284, 2
        %v286 = vadd.f32 %v284, %v285
        %v287 = vrot.slane %v286, 1
        %v288 = vadd.f32 %v286, %v287
        %v289 = vrcp.pop %v288
        %v290 = vmul.f32 %v288, %v289
        %v291 = vsub.f32 2.0, %v290
        %v292 = vmul.f32 %v289, %v291
        %v293 = vmul.f32 %v281, %v292
        %295 = vset.pattern.permute.xlu0 0
        %296 = vperm.xlu0 %295, %v293
        %v297 = vpop.permute.xlu0 %296
        %v299 = vmul.f32 %v297, %v230
        %v300 = vsel %vm234, %v299, 0.0
        %v301 = vrot.slane %v300, 4
        %v302 = vadd.f32 %v300, %v301
        %v303 = vrot.slane %v302, 2
        %v304 = vadd.f32 %v302, %v303
        %v305 = vrot.slane %v304, 1
        %v306 = vadd.f32 %v304, %v305
        %vm307 = vcmask 253952
        %308 = vst.msk [vmem:[%s216] sm:$0x1] %vm307, %v306
        %s309 = sand.u32 %s139, 1
        %s310 = scalar_lea.sflag [#allocation4], %s309
        %s311 = sand.u32 %s139, 1
        %s312 = scalar_lea.vmem [#allocation3], %s311
        // Predicated region
        $region41: #{tpu_custom_call.1} parent=39 // pred_check
          %p313 = pneg %p149
        $region42: #{tpu_custom_call.1} parent=39 // pred_check_branch
          %315 = sbr.rel (%p313) target = $region44
        $region43: #{tpu_custom_call.1} parent=39 // pred_region
          %317 = vsyncadd %s310, 0
          %s318 = scalar_lea.hbm %s5, %s21
          %s320 = sshll.u32 %s312, 4
          %s321 = int_to_ptr.vmem [resolvable:$true] %s320
          %s322 = sshll.u32 %s318, 4
          %s323 = int_to_ptr.hbm [resolvable:$true] %s322
          %325 = dma.vmem_to_hbm [thread:$0]  %s321, 16, %s323, %s310
        $region44: #{tpu_custom_call.1} parent=39 // pred_fallthru
          _
      $region40: #{tpu_custom_call.1} parent=5 // pred_fallthru
        _
      %p326 = scmp.le.s32.totalorder 2, %s16
      // Predicated region
      $region45: #{tpu_custom_call.1} parent=5 // pred_check
        %p327 = pneg %p326
      $region46: #{tpu_custom_call.1} parent=5 // pred_check_branch
        %329 = sbr.rel (%p327) target = $region48
      $region47: #{tpu_custom_call.1} parent=5 // pred_region
        %s330 = ssub.s32 %s16, 2
        // Predicated region
        $region49: #{tpu_custom_call.1} parent=47 // pred_check
          %p331 = pneg %p155
        $region50: #{tpu_custom_call.1} parent=47 // pred_check_branch
          %333 = sbr.rel (%p331) target = $region52
        $region51: #{tpu_custom_call.1} parent=47 // pred_region
          %s334 = sand.u32 %s140, 1
          %s335 = scalar_lea.sflag [#allocation4], %s334
          %s336 = sand.u32 %s140, 1
          %s337 = scalar_lea.vmem [#allocation3], %s336
          %339 = dma.done %s335, 16
        $region52: #{tpu_custom_call.1} parent=47 // pred_fallthru
          _
      $region48: #{tpu_custom_call.1} parent=5 // pred_fallthru
        _
    $region6: #{tpu_custom_call.1} parent=1 // loop_footer
      %s20 = sadd.s32 1, %s16
    $region7: #{tpu_custom_call.1} parent=1 // loop_footer_branch
      %15 = sbr.rel target = $region3
    $region8: #{tpu_custom_call.1} parent=1 // loop_exit
      _
    %340 = vsyncpa [#allocation4], 1
    %s341 = scalar_lea.sflag [#allocation4], 1
    %342 = vsyncpa %s341, 1

</llo_original>
